<compile_context>
chip_gen: v7x
topology: tpu7x:2x2x1
jax: 0.10.0
libtpu: 0.0.40
codegen_flags: <defaults>
</compile_context>

<pallas_src>
import functools

import jax
import jax.numpy as jnp
from jax import lax
from jax.experimental import pallas as pl
from jax.experimental.pallas import tpu as pltpu

C1 = 0.01 ** 2
C2 = 0.03 ** 2


def _ssim_kernel(x_ref, y_ref, o_ref, *, plane_w):
    """One grid step: a (B, H, PW) slab of lane-packed planes."""
    x = x_ref[...].astype(jnp.float32)          # (B, H, PW)
    y = y_ref[...].astype(jnp.float32)
    b, h, pw = x.shape

    # Pool x, y, x^2, y^2, x*y together: every lane/sublane shift is shared
    # 5-ways.  Keep the tensor 3-D; the leading axis is just vreg iteration.
    stacked = jnp.concatenate([x, y, x * x, y * y, x * y], axis=0)  # (5B,H,PW)

    # ---- 3-tap reflected sum along W (lane axis) via XLU rotations. ----
    left = pltpu.roll(stacked, shift=1, axis=2)        # left[j]  = a[j-1]
    right = pltpu.roll(stacked, shift=pw - 1, axis=2)  # right[j] = a[j+1]
    col = lax.broadcasted_iota(jnp.int32, (1, 1, pw), 2)
    if plane_w != pw:                                  # lane-packed planes
        col = col % plane_w
    # Reflection pad: column -1 -> column 1, column W -> column W-2.  The fix
    # also overwrites the roll's wrap-around / cross-plane columns.
    lfix = jnp.where(col == 0, right, left)
    rfix = jnp.where(col == plane_w - 1, left, right)
    cs = stacked + lfix + rfix                         # (5B, H, PW)

    # ---- 3-tap reflected sum along H (sublane axis). ----
    up = pltpu.roll(cs, shift=1, axis=1)               # up[i]   = cs[i-1]
    down = pltpu.roll(cs, shift=h - 1, axis=1)         # down[i] = cs[i+1]
    row = lax.broadcasted_iota(jnp.int32, (1, h, 1), 1)
    ufix = jnp.where(row == 0, down, up)               # row -1 -> row 1
    dfix = jnp.where(row == h - 1, up, down)           # row H  -> row H-2
    pooled = (cs + ufix + dfix) * (1.0 / 9.0)          # 3x3 avg pool

    mu_x = pooled[0 * b:1 * b]
    mu_y = pooled[1 * b:2 * b]
    sigma_x = pooled[2 * b:3 * b] - mu_x * mu_x
    sigma_y = pooled[3 * b:4 * b] - mu_y * mu_y
    sigma_xy = pooled[4 * b:5 * b] - mu_x * mu_y

    ssim_n = (2.0 * mu_x * mu_y + C1) * (2.0 * sigma_xy + C2)
    ssim_d = (mu_x * mu_x + mu_y * mu_y + C1) * (sigma_x + sigma_y + C2)
    # EUP approx reciprocal + one Newton-Raphson step (~1e-7 rel error),
    # cheaper than the exact-reciprocal expansion on the pressured VALU slot.
    r = pl.reciprocal(ssim_d, approx=True)
    r = r * (2.0 - ssim_d * r)
    ssim = (1.0 - ssim_n * r) * 0.5
    o_ref[...] = jnp.clip(ssim, 0.0, 1.0).astype(o_ref.dtype)


def _divisors(n):
    return [d for d in range(1, n + 1) if n % d == 0]


def ssim(x, y):
    """x, y: (N, C, H, W). Returns clamp((1 - SSIM)/2, 0, 1), same shape/dtype."""
    assert x.shape == y.shape
    n, c, h, w = x.shape
    assert h >= 2 and w >= 2, "ReflectionPad2d(1) requires H, W >= 2"
    p = n * c

    # --- VMEM-aware sizing (v7x has 64 MiB/TC vs 128 MiB on v5e/v6e). ---
    try:
        info = pltpu.get_tpu_info()
        vmem_cap = int(getattr(info, "vmem_capacity_bytes", 64 * 1024 * 1024))
    except Exception:
        vmem_cap = 64 * 1024 * 1024  # conservative fallback

    # --- Lane packing: narrow W maps poorly to the 128-lane axis (W=16 ->
    # 12.5% vreg utilization + masked stores), so pack G planes side-by-side
    # along W.  One wrapper transpose buys dense lanes. ---
    if w >= 128:
        g = 1
    else:
        g = p  # best effort if no divisor reaches 128 lanes
        for d in _divisors(p):
            if d * w >= 128:
                g = d
                break
    q = p // g
    pw = g * w

    xf = x.reshape(p, h, w)
    yf = y.reshape(p, h, w)
    if g > 1:
        xf = xf.reshape(q, g, h, w).transpose(0, 2, 1, 3).reshape(q, h, pw)
        yf = yf.reshape(q, g, h, w).transpose(0, 2, 1, 3).reshape(q, h, pw)

    # --- Batch B packed slabs per grid step; keep ~32x f32 intermediates plus
    # double-buffered pipeline buffers inside half of VMEM. ---
    budget = vmem_cap // 2
    slab_bytes = 32 * h * pw * 4
    b_max = max(1, budget // slab_bytes)
    b = max(d for d in _divisors(q) if d <= b_max)

    out = pl.pallas_call(
        functools.partial(_ssim_kernel, plane_w=w),
        out_shape=jax.ShapeDtypeStruct((q, h, pw), x.dtype),
        grid_spec=pltpu.PrefetchScalarGridSpec(
            num_scalar_prefetch=0,
            grid=(q // b,),
            in_specs=[
                pl.BlockSpec((b, h, pw), lambda i: (i, 0, 0)),
                pl.BlockSpec((b, h, pw), lambda i: (i, 0, 0)),
            ],
            out_specs=pl.BlockSpec((b, h, pw), lambda i: (i, 0, 0)),
        ),
        compiler_params=pltpu.CompilerParams(
            dimension_semantics=("parallel",),
            vmem_limit_bytes=int(vmem_cap * 3 // 4),
        ),
    )(xf, yf)

    if g > 1:
        out = out.reshape(q, h, g, w).transpose(0, 2, 1, 3).reshape(p, h, w)
    return out.reshape(n, c, h, w)


def _ssim_ref(x, y):
    """Pure-JAX reference mirroring the PyTorch SSIM module."""
    pad = ((0, 0), (0, 0), (1, 1), (1, 1))
    xp = jnp.pad(x, pad, mode="reflect")
    yp = jnp.pad(y, pad, mode="reflect")

    def pool(a):
        n, c, hp, wp = a.shape
        h, w = hp - 2, wp - 2
        s = jnp.zeros((n, c, h, w), a.dtype)
        for di in range(3):
            for dj in range(3):
                s = s + a[:, :, di:di + h, dj:dj + w]
        return s / 9.0

    mu_x = pool(xp)
    mu_y = pool(yp)
    sigma_x = pool(xp * xp) - mu_x ** 2
    sigma_y = pool(yp * yp) - mu_y ** 2
    sigma_xy = pool(xp * yp) - mu_x * mu_y
    ssim_n = (2 * mu_x * mu_y + C1) * (2 * sigma_xy + C2)
    ssim_d = (mu_x ** 2 + mu_y ** 2 + C1) * (sigma_x + sigma_y + C2)
    return jnp.clip((1 - ssim_n / ssim_d) / 2, 0.0, 1.0)


if __name__ == "__main__":
    key = jax.random.PRNGKey(0)
    k1, k2 = jax.random.split(key)
    N, C, H, W = 2, 4, 16, 16
    x = jax.random.uniform(k1, (N, C, H, W), dtype=jnp.float32)
    y = jax.random.uniform(k2, (N, C, H, W), dtype=jnp.float32)

    out = jax.block_until_ready(ssim(x, y))
    ref = jax.block_until_ready(_ssim_ref(x, y))

    assert out.shape == (N, C, H, W), out.shape
    assert out.dtype == x.dtype, out.dtype
    err = float(jnp.max(jnp.abs(out.astype(jnp.float32) - ref)))
    assert err < 1e-5, err
    print("KERNEL_OK")
</pallas_src>

<mosaic_0001>
module attributes {stable_mosaic.version = 11 : i64} {
  func.func @_ssim_kernel(%arg0: i32, %arg1: memref<1x16x128xf32, #tpu.memory_space<vmem>>, %arg2: memref<1x16x128xf32, #tpu.memory_space<vmem>>, %arg3: memref<1x16x128xf32, #tpu.memory_space<vmem>>) attributes {dimension_semantics = [#tpu.dimension_semantics<parallel>], iteration_bounds = array<i64: 1>, scalar_prefetch = 0 : i64, scratch_operands = 0 : i64, tpu.core_type = #tpu.core_type<tc>, window_params = [{transform_indices = @transform_0, window_bounds = array<i64: 1, 16, 128>}, {transform_indices = @transform_1, window_bounds = array<i64: 1, 16, 128>}, {transform_indices = @transform_2, window_bounds = array<i64: 1, 16, 128>}]} {
    %c0 = arith.constant 0 : index
    %c0_0 = arith.constant 0 : index
    %c0_1 = arith.constant 0 : index
    %0 = vector.load %arg1[%c0, %c0_0, %c0_1] : memref<1x16x128xf32, #tpu.memory_space<vmem>>, vector<1x16x128xf32>
    %c0_2 = arith.constant 0 : index
    %c0_3 = arith.constant 0 : index
    %c0_4 = arith.constant 0 : index
    %1 = vector.load %arg2[%c0_2, %c0_3, %c0_4] : memref<1x16x128xf32, #tpu.memory_space<vmem>>, vector<1x16x128xf32>
    %2 = arith.mulf %0, %0 : vector<1x16x128xf32>
    %3 = arith.mulf %1, %1 : vector<1x16x128xf32>
    %4 = arith.mulf %0, %1 : vector<1x16x128xf32>
    %5 = tpu.concatenate %0, %1, %2, %3, %4 in 0 : vector<1x16x128xf32>, vector<1x16x128xf32>, vector<1x16x128xf32>, vector<1x16x128xf32>, vector<1x16x128xf32> -> vector<5x16x128xf32>
    %c1_i32 = arith.constant 1 : i32
    %6 = tpu.dynamic_rotate %5 by %c1_i32 dim 2 : vector<5x16x128xf32>, i32 -> vector<5x16x128xf32>
    %c127_i32 = arith.constant 127 : i32
    %7 = tpu.dynamic_rotate %5 by %c127_i32 dim 2 : vector<5x16x128xf32>, i32 -> vector<5x16x128xf32>
    %8 = tpu.iota {dimensions = array<i32: 2>} : vector<1x1x128xi32>
    %c16_i32 = arith.constant 16 : i32
    %c0_i32 = arith.constant 0 : i32
    %9 = arith.cmpi eq, %c16_i32, %c0_i32 : i32
    %c1_i32_5 = arith.constant 1 : i32
    %10 = arith.select %9, %c1_i32_5, %c16_i32 : i32
    %11 = vector.broadcast %10 : i32 to vector<1x1x128xi32>
    %12 = arith.remsi %8, %11 : vector<1x1x128xi32>
    %c0_i32_6 = arith.constant 0 : i32
    %13 = vector.broadcast %c0_i32_6 : i32 to vector<1x1x128xi32>
    %14 = arith.cmpi ne, %12, %13 : vector<1x1x128xi32>
    %c0_i32_7 = arith.constant 0 : i32
    %15 = vector.broadcast %c0_i32_7 : i32 to vector<1x1x128xi32>
    %16 = arith.cmpi slt, %12, %15 : vector<1x1x128xi32>
    %c0_i32_8 = arith.constant 0 : i32
    %17 = arith.cmpi slt, %10, %c0_i32_8 : i32
    %18 = vector.broadcast %17 : i1 to vector<1x1x128xi1>
    %19 = vector.broadcast %18 : vector<1x1x128xi1> to vector<1x1x128xi1>
    %20 = arith.xori %16, %19 : vector<1x1x128xi1>
    %21 = arith.andi %20, %14 : vector<1x1x128xi1>
    %22 = vector.broadcast %10 : i32 to vector<1x1x128xi32>
    %23 = arith.addi %12, %22 : vector<1x1x128xi32>
    %24 = arith.select %21, %23, %12 : vector<1x1x128xi1>, vector<1x1x128xi32>
    %c0_i32_9 = arith.constant 0 : i32
    %25 = vector.broadcast %c0_i32_9 : i32 to vector<1x1x128xi32>
    %26 = arith.cmpi eq, %24, %25 : vector<1x1x128xi32>
    %27 = vector.shape_cast %26 : vector<1x1x128xi1> to vector<1x1x128xi1>
    %28 = vector.broadcast %27 : vector<1x1x128xi1> to vector<5x16x128xi1>
    %29 = arith.select %28, %7, %6 : vector<5x16x128xi1>, vector<5x16x128xf32>
    %c15_i32 = arith.constant 15 : i32
    %30 = vector.broadcast %c15_i32 : i32 to vector<1x1x128xi32>
    %31 = arith.cmpi eq, %24, %30 : vector<1x1x128xi32>
    %32 = vector.shape_cast %31 : vector<1x1x128xi1> to vector<1x1x128xi1>
    %33 = vector.broadcast %32 : vector<1x1x128xi1> to vector<5x16x128xi1>
    %34 = arith.select %33, %6, %7 : vector<5x16x128xi1>, vector<5x16x128xf32>
    %35 = arith.addf %5, %29 : vector<5x16x128xf32>
    %36 = arith.addf %35, %34 : vector<5x16x128xf32>
    %c1_i32_10 = arith.constant 1 : i32
    %37 = tpu.dynamic_rotate %36 by %c1_i32_10 dim 1 : vector<5x16x128xf32>, i32 -> vector<5x16x128xf32>
    %c15_i32_11 = arith.constant 15 : i32
    %38 = tpu.dynamic_rotate %36 by %c15_i32_11 dim 1 : vector<5x16x128xf32>, i32 -> vector<5x16x128xf32>
    %39 = tpu.iota {dimensions = array<i32: 1>} : vector<1x16x1xi32>
    %c0_i32_12 = arith.constant 0 : i32
    %40 = vector.broadcast %c0_i32_12 : i32 to vector<1x16x1xi32>
    %41 = arith.cmpi eq, %39, %40 : vector<1x16x1xi32>
    %42 = vector.shape_cast %41 : vector<1x16x1xi1> to vector<1x16x1xi1>
    %43 = vector.broadcast %42 : vector<1x16x1xi1> to vector<5x16x128xi1>
    %44 = arith.select %43, %38, %37 : vector<5x16x128xi1>, vector<5x16x128xf32>
    %c15_i32_13 = arith.constant 15 : i32
    %45 = vector.broadcast %c15_i32_13 : i32 to vector<1x16x1xi32>
    %46 = arith.cmpi eq, %39, %45 : vector<1x16x1xi32>
    %47 = vector.shape_cast %46 : vector<1x16x1xi1> to vector<1x16x1xi1>
    %48 = vector.broadcast %47 : vector<1x16x1xi1> to vector<5x16x128xi1>
    %49 = arith.select %48, %37, %38 : vector<5x16x128xi1>, vector<5x16x128xf32>
    %50 = arith.addf %36, %44 : vector<5x16x128xf32>
    %51 = arith.addf %50, %49 : vector<5x16x128xf32>
    %cst = arith.constant 0.111111112 : f32
    %52 = vector.broadcast %cst : f32 to vector<5x16x128xf32>
    %53 = arith.mulf %51, %52 : vector<5x16x128xf32>
    %54 = vector.extract_strided_slice %53 {offsets = [0, 0, 0], sizes = [1, 16, 128], strides = [1, 1, 1]} : vector<5x16x128xf32> to vector<1x16x128xf32>
    %55 = vector.extract_strided_slice %53 {offsets = [1, 0, 0], sizes = [1, 16, 128], strides = [1, 1, 1]} : vector<5x16x128xf32> to vector<1x16x128xf32>
    %56 = vector.extract_strided_slice %53 {offsets = [2, 0, 0], sizes = [1, 16, 128], strides = [1, 1, 1]} : vector<5x16x128xf32> to vector<1x16x128xf32>
    %57 = arith.mulf %54, %54 : vector<1x16x128xf32>
    %58 = arith.subf %56, %57 : vector<1x16x128xf32>
    %59 = vector.extract_strided_slice %53 {offsets = [3, 0, 0], sizes = [1, 16, 128], strides = [1, 1, 1]} : vector<5x16x128xf32> to vector<1x16x128xf32>
    %60 = arith.mulf %55, %55 : vector<1x16x128xf32>
    %61 = arith.subf %59, %60 : vector<1x16x128xf32>
    %62 = vector.extract_strided_slice %53 {offsets = [4, 0, 0], sizes = [1, 16, 128], strides = [1, 1, 1]} : vector<5x16x128xf32> to vector<1x16x128xf32>
    %63 = arith.mulf %54, %55 : vector<1x16x128xf32>
    %64 = arith.subf %62, %63 : vector<1x16x128xf32>
    %cst_14 = arith.constant 2.000000e+00 : f32
    %65 = vector.broadcast %cst_14 : f32 to vector<1x16x128xf32>
    %66 = arith.mulf %65, %54 : vector<1x16x128xf32>
    %67 = arith.mulf %66, %55 : vector<1x16x128xf32>
    %cst_15 = arith.constant 9.99999974E-5 : f32
    %68 = vector.broadcast %cst_15 : f32 to vector<1x16x128xf32>
    %69 = arith.addf %67, %68 : vector<1x16x128xf32>
    %cst_16 = arith.constant 2.000000e+00 : f32
    %70 = vector.broadcast %cst_16 : f32 to vector<1x16x128xf32>
    %71 = arith.mulf %70, %64 : vector<1x16x128xf32>
    %cst_17 = arith.constant 8.99999984E-4 : f32
    %72 = vector.broadcast %cst_17 : f32 to vector<1x16x128xf32>
    %73 = arith.addf %71, %72 : vector<1x16x128xf32>
    %74 = arith.mulf %69, %73 : vector<1x16x128xf32>
    %75 = arith.mulf %54, %54 : vector<1x16x128xf32>
    %76 = arith.mulf %55, %55 : vector<1x16x128xf32>
    %77 = arith.addf %75, %76 : vector<1x16x128xf32>
    %cst_18 = arith.constant 9.99999974E-5 : f32
    %78 = vector.broadcast %cst_18 : f32 to vector<1x16x128xf32>
    %79 = arith.addf %77, %78 : vector<1x16x128xf32>
    %80 = arith.addf %58, %61 : vector<1x16x128xf32>
    %cst_19 = arith.constant 8.99999984E-4 : f32
    %81 = vector.broadcast %cst_19 : f32 to vector<1x16x128xf32>
    %82 = arith.addf %80, %81 : vector<1x16x128xf32>
    %83 = arith.mulf %79, %82 : vector<1x16x128xf32>
    %84 = tpu.reciprocal %83 {approx = true} : vector<1x16x128xf32> -> vector<1x16x128xf32>
    %85 = arith.mulf %83, %84 : vector<1x16x128xf32>
    %cst_20 = arith.constant 2.000000e+00 : f32
    %86 = vector.broadcast %cst_20 : f32 to vector<1x16x128xf32>
    %87 = arith.subf %86, %85 : vector<1x16x128xf32>
    %88 = arith.mulf %84, %87 : vector<1x16x128xf32>
    %89 = arith.mulf %74, %88 : vector<1x16x128xf32>
    %cst_21 = arith.constant 1.000000e+00 : f32
    %90 = vector.broadcast %cst_21 : f32 to vector<1x16x128xf32>
    %91 = arith.subf %90, %89 : vector<1x16x128xf32>
    %cst_22 = arith.constant 5.000000e-01 : f32
    %92 = vector.broadcast %cst_22 : f32 to vector<1x16x128xf32>
    %93 = arith.mulf %91, %92 : vector<1x16x128xf32>
    %cst_23 = arith.constant 0.000000e+00 : f32
    %cst_24 = arith.constant 1.000000e+00 : f32
    %94 = vector.broadcast %cst_23 : f32 to vector<1x16x128xf32>
    %95 = arith.maximumf %94, %93 : vector<1x16x128xf32>
    %96 = vector.broadcast %cst_24 : f32 to vector<1x16x128xf32>
    %97 = arith.minimumf %96, %95 : vector<1x16x128xf32>
    %c0_25 = arith.constant 0 : index
    %c0_26 = arith.constant 0 : index
    %c0_27 = arith.constant 0 : index
    %98 = vector.load %arg3[%c0_25, %c0_26, %c0_27] : memref<1x16x128xf32, #tpu.memory_space<vmem>>, vector<1x16x128xf32>
    tpu.vector_store %arg3[%c0_25, %c0_26, %c0_27], %97 {strides = array<i32>} : memref<1x16x128xf32, #tpu.memory_space<vmem>>, vector<1x16x128xf32>,
    return
  }
  func.func @transform_0(%arg0: i32) -> (i32, i32, i32) {
    %c0_i32 = arith.constant 0 : i32
    %c0_i32_0 = arith.constant 0 : i32
    %c0_i32_1 = arith.constant 0 : i32
    return %arg0, %c0_i32, %c0_i32_0 : i32, i32, i32
  }
  func.func @transform_1(%arg0: i32) -> (i32, i32, i32) {
    %c0_i32 = arith.constant 0 : i32
    %c0_i32_0 = arith.constant 0 : i32
    %c0_i32_1 = arith.constant 0 : i32
    return %arg0, %c0_i32, %c0_i32_0 : i32, i32, i32
  }
  func.func @transform_2(%arg0: i32) -> (i32, i32, i32) {
    %c0_i32 = arith.constant 0 : i32
    %c0_i32_0 = arith.constant 0 : i32
    %c0_i32_1 = arith.constant 0 : i32
    return %arg0, %c0_i32, %c0_i32_0 : i32, i32, i32
  }
}

</mosaic_0001>

<llo_original>
// kernel: tpu_custom_call.1
$region0: #{tpu_custom_call.1}
  #allocation0 [shape = 'u32[]', space=smem, size = 0x4, offset = 0x4, fixed_abs, tag = 'smem constant byte address 0x4 - core index']
  #allocation1 [shape = 'u32[144,128]{1,0:T(1,128)}', space=vmem, size = 0x12000, scoped, tag = 'internal scratch']
  %s0 = inlined_call_operand.hbm [shape: f32[1,16,128], index: 0, kind: input, shape index: {}]
  %s1 = inlined_call_operand.hbm [shape: f32[1,16,128], index: 1, kind: input, shape index: {}]
  %s2 = inlined_call_operand.hbm [shape: f32[1,16,128], index: 2, kind: output, shape index: {}]
  %s3 = sld [smem:[#allocation0]]
  $region26: #{tpu_custom_call.1} parent=0
    _
  %s5 = ssub.s32 1, %s3
  %s6 = scalar_select 0, %s5, %s3
  $region1: #{tpu_custom_call.1} parent=0
    #allocation2 [shape = 'u8[8192]{0}', space=vmem, size = 0x2000, scoped, tag = 'input window, operand 0, single buffered']
    #allocation3 [shape = 's32[1]{0}', space=sflag, size = 0x4, scoped, tag = 'scoped memory for tpu_custom_call.1']
    #allocation4 [shape = 's32[1]{0}', space=sflag, size = 0x4, scoped, tag = 'scoped memory for tpu_custom_call.1']
    #allocation5 [shape = 'u8[8192]{0}', space=vmem, size = 0x2000, scoped, tag = 'input window, operand 1, single buffered']
    #allocation6 [shape = 's32[1]{0}', space=sflag, size = 0x4, scoped, tag = 'scoped memory for tpu_custom_call.1']
    #allocation7 [shape = 'u8[8192]{0}', space=vmem, size = 0x2000, scoped, tag = 'output window, operand 0, single buffered']
    %7 = vsyncpa [#allocation3], 0
    %8 = vsyncpa [#allocation6], 0
    %9 = vsyncpa [#allocation4], 0
    // Predicated region
    $region2: #{tpu_custom_call.1} parent=1 // pred_check
      _
    $region3: #{tpu_custom_call.1} parent=1 // pred_check_branch
      %11 = sbr.rel (0) target = $region5
    $region4: #{tpu_custom_call.1} parent=1 // pred_region
      %s13 = ssub.s32 256, 256
      %14 = vsyncadd [#allocation3], %s13
      %s15 = sshll.u32 [#allocation2], 4
      %s16 = int_to_ptr.vmem [resolvable:$true] %s15
      %21 = dma.hbm_to_vmem [thread:$0]  %s0, 256, %s16, [#allocation3], 128, 128, 8
    $region5: #{tpu_custom_call.1} parent=1 // pred_fallthru
      _
    // Predicated region
    $region6: #{tpu_custom_call.1} parent=1 // pred_check
      _
    $region7: #{tpu_custom_call.1} parent=1 // pred_check_branch
      %23 = sbr.rel (0) target = $region9
    $region8: #{tpu_custom_call.1} parent=1 // pred_region
      %s25 = ssub.s32 256, 256
      %26 = vsyncadd [#allocation6], %s25
      %s27 = sshll.u32 [#allocation5], 4
      %s28 = int_to_ptr.vmem [resolvable:$true] %s27
      %33 = dma.hbm_to_vmem [thread:$0]  %s1, 256, %s28, [#allocation6], 128, 128, 8
    $region9: #{tpu_custom_call.1} parent=1 // pred_fallthru
      _
    // Predicated region
    $region10: #{tpu_custom_call.1} parent=1 // pred_check
      _
    $region11: #{tpu_custom_call.1} parent=1 // pred_check_branch
      %35 = sbr.rel (0) target = $region13
    $region12: #{tpu_custom_call.1} parent=1 // pred_region
      %36 = dma.done [#allocation3], 256
    $region13: #{tpu_custom_call.1} parent=1 // pred_fallthru
      _
    // Predicated region
    $region14: #{tpu_custom_call.1} parent=1 // pred_check
      _
    $region15: #{tpu_custom_call.1} parent=1 // pred_check_branch
      %38 = sbr.rel (0) target = $region17
    $region16: #{tpu_custom_call.1} parent=1 // pred_region
      %39 = dma.done [#allocation6], 256
    $region17: #{tpu_custom_call.1} parent=1 // pred_fallthru
      _
    %v40 = vld [vmem:[#allocation2] sm:$0xff]
    %v41 = vld [vmem:[#allocation2 + $0x8] sm:$0xff]
    %v42 = vld [vmem:[#allocation5] sm:$0xff]
    %v43 = vld [vmem:[#allocation5 + $0x8] sm:$0xff]
    %v44 = vmul.f32 %v40, %v40
    %v45 = vmul.f32 %v41, %v41
    %v46 = vmul.f32 %v42, %v42
    %v47 = vmul.f32 %v43, %v43
    %v48 = vmul.f32 %v40, %v42
    %v49 = vmul.f32 %v41, %v43
    %50 = vrot.lane.b32.xlu0 %v40, 1
    %v51 = vpop.permute.xlu0 %50
    %52 = vrot.lane.b32.xlu0 %v41, 1
    %v53 = vpop.permute.xlu0 %52
    %54 = vrot.lane.b32.xlu0 %v42, 1
    %v55 = vpop.permute.xlu0 %54
    %56 = vrot.lane.b32.xlu0 %v43, 1
    %v57 = vpop.permute.xlu0 %56
    %58 = vrot.lane.b32.xlu0 %v44, 1
    %v59 = vpop.permute.xlu0 %58
    %60 = vrot.lane.b32.xlu0 %v45, 1
    %v61 = vpop.permute.xlu0 %60
    %62 = vrot.lane.b32.xlu0 %v46, 1
    %v63 = vpop.permute.xlu0 %62
    %64 = vrot.lane.b32.xlu0 %v47, 1
    %v65 = vpop.permute.xlu0 %64
    %66 = vrot.lane.b32.xlu0 %v48, 1
    %v67 = vpop.permute.xlu0 %66
    %68 = vrot.lane.b32.xlu0 %v49, 1
    %v69 = vpop.permute.xlu0 %68
    %70 = vrot.lane.b32.xlu0 %v40, 127
    %v71 = vpop.permute.xlu0 %70
    %72 = vrot.lane.b32.xlu0 %v41, 127
    %v73 = vpop.permute.xlu0 %72
    %74 = vrot.lane.b32.xlu0 %v42, 127
    %v75 = vpop.permute.xlu0 %74
    %76 = vrot.lane.b32.xlu0 %v43, 127
    %v77 = vpop.permute.xlu0 %76
    %78 = vrot.lane.b32.xlu0 %v44, 127
    %v79 = vpop.permute.xlu0 %78
    %80 = vrot.lane.b32.xlu0 %v45, 127
    %v81 = vpop.permute.xlu0 %80
    %82 = vrot.lane.b32.xlu0 %v46, 127
    %v83 = vpop.permute.xlu0 %82
    %84 = vrot.lane.b32.xlu0 %v47, 127
    %v85 = vpop.permute.xlu0 %84
    %86 = vrot.lane.b32.xlu0 %v48, 127
    %v87 = vpop.permute.xlu0 %86
    %88 = vrot.lane.b32.xlu0 %v49, 127
    %v89 = vpop.permute.xlu0 %88
    %v90 = vlaneseq
    %v91 = vand.u32 %v90, 127
    %vm92 = vcmp.lt.s32.totalorder %v91, 0
    %v93 = vsub.s32 0, %v91
    %v94 = vsel %vm92, %v93, %v91
    %v95 = vshrl.u32 %v94, 4
    %v96 = vand.u32 %v94, 15
    %v97 = vsub.s32 0, %v96
    %v98 = vsel %vm92, %v97, %v96
    %vm99 = vcmp.ne.s32.totalorder %v98, 0
    %vm100 = vcmp.lt.s32.totalorder %v98, 0
    %vm101 = vmand %vm100, %vm99
    %v102 = vadd.s32 %v98, 16
    %v103 = vsel %vm101, %v102, %v98
    %vm104 = vcmp.eq.s32.totalorder %v103, 0
    %v105 = vsel %vm104, 1, 0
    %vm106 = vcmp.eq.s32.totalorder %v105, 1
    %v107 = vsel %vm106, %v71, %v51
    %v108 = vsel %vm106, %v73, %v53
    %v109 = vsel %vm106, %v75, %v55
    %v110 = vsel %vm106, %v77, %v57
    %v111 = vsel %vm106, %v79, %v59
    %v112 = vsel %vm106, %v81, %v61
    %v113 = vsel %vm106, %v83, %v63
    %v114 = vsel %vm106, %v85, %v65
    %v115 = vsel %vm106, %v87, %v67
    %v116 = vsel %vm106, %v89, %v69
    %vm117 = vcmp.eq.s32.totalorder %v103, 15
    %v118 = vsel %vm117, 1, 0
    %vm119 = vcmp.eq.s32.totalorder %v118, 1
    %v120 = vsel %vm119, %v51, %v71
    %v121 = vsel %vm119, %v53, %v73
    %v122 = vsel %vm119, %v55, %v75
    %v123 = vsel %vm119, %v57, %v77
    %v124 = vsel %vm119, %v59, %v79
    %v125 = vsel %vm119, %v61, %v81
    %v126 = vsel %vm119, %v63, %v83
    %v127 = vsel %vm119, %v65, %v85
    %v128 = vsel %vm119, %v67, %v87
    %v129 = vsel %vm119, %v69, %v89
    %v130 = vadd.f32 %v40, %v107
    %v131 = vadd.f32 %v41, %v108
    %v132 = vadd.f32 %v42, %v109
    %v133 = vadd.f32 %v43, %v110
    %v134 = vadd.f32 %v44, %v111
    %v135 = vadd.f32 %v45, %v112
    %v136 = vadd.f32 %v46, %v113
    %v137 = vadd.f32 %v47, %v114
    %v138 = vadd.f32 %v48, %v115
    %v139 = vadd.f32 %v49, %v116
    %v140 = vadd.f32 %v130, %v120
    %v141 = vadd.f32 %v131, %v121
    %v142 = vadd.f32 %v132, %v122
    %v143 = vadd.f32 %v133, %v123
    %v144 = vadd.f32 %v134, %v124
    %v145 = vadd.f32 %v135, %v125
    %v146 = vadd.f32 %v136, %v126
    %v147 = vadd.f32 %v137, %v127
    %v148 = vadd.f32 %v138, %v128
    %v149 = vadd.f32 %v139, %v129
    %v150 = vrot.slane %v140, 7
    %v151 = vrot.slane %v142, 7
    %v152 = vrot.slane %v144, 7
    %v153 = vrot.slane %v146, 7
    %v154 = vrot.slane %v148, 7
    %v155 = vrot.slane %v141, 7
    %v156 = vrot.slane %v143, 7
    %v157 = vrot.slane %v145, 7
    %v158 = vrot.slane %v147, 7
    %v159 = vrot.slane %v149, 7
    %v160 = vlaneseq
    %v161 = vshrl.u32 %v160, 7
    %vm162 = vcmp.lt.s32.totalorder %v161, 1
    %v163 = vsel %vm162, %v150, %v155
    %v164 = vsel %vm162, %v151, %v156
    %v165 = vsel %vm162, %v152, %v157
    %v166 = vsel %vm162, %v153, %v158
    %v167 = vsel %vm162, %v154, %v159
    %v168 = vsel %vm162, %v155, %v150
    %v169 = vsel %vm162, %v156, %v151
    %v170 = vsel %vm162, %v157, %v152
    %v171 = vsel %vm162, %v158, %v153
    %v172 = vsel %vm162, %v159, %v154
    %v173 = vrot.slane %v140, 1
    %v174 = vrot.slane %v142, 1
    %v175 = vrot.slane %v144, 1
    %v176 = vrot.slane %v146, 1
    %v177 = vrot.slane %v148, 1
    %v178 = vrot.slane %v141, 1
    %v179 = vrot.slane %v143, 1
    %v180 = vrot.slane %v145, 1
    %v181 = vrot.slane %v147, 1
    %v182 = vrot.slane %v149, 1
    %vm183 = vcmp.lt.s32.totalorder %v161, 7
    %v184 = vsel %vm183, %v173, %v178
    %v185 = vsel %vm183, %v174, %v179
    %v186 = vsel %vm183, %v175, %v180
    %v187 = vsel %vm183, %v176, %v181
    %v188 = vsel %vm183, %v177, %v182
    %v189 = vsel %vm183, %v178, %v173
    %v190 = vsel %vm183, %v179, %v174
    %v191 = vsel %vm183, %v180, %v175
    %v192 = vsel %vm183, %v181, %v176
    %v193 = vsel %vm183, %v182, %v177
    %v194 = vadd.s32 %v161, 8
    %vm195 = vcmp.eq.s32.totalorder %v161, 0
    %vm196 = vcmp.eq.s32.totalorder %v194, 0
    %v197 = vsel %vm195, 1, 0
    %v198 = vsel %vm196, 1, 0
    %vm199 = vcmp.eq.s32.totalorder %v197, 1
    %vm200 = vcmp.eq.s32.totalorder %v198, 1
    %v201 = vsel %vm199, %v184, %v168
    %v202 = vsel %vm200, %v189, %v163
    %v203 = vsel %vm199, %v185, %v169
    %v204 = vsel %vm200, %v190, %v164
    %v205 = vsel %vm199, %v186, %v170
    %v206 = vsel %vm200, %v191, %v165
    %v207 = vsel %vm199, %v187, %v171
    %v208 = vsel %vm200, %v192, %v166
    %v209 = vsel %vm199, %v188, %v172
    %v210 = vsel %vm200, %v193, %v167
    %vm211 = vcmp.eq.s32.totalorder %v161, 15
    %vm212 = vcmp.eq.s32.totalorder %v194, 15
    %v213 = vsel %vm211, 1, 0
    %v214 = vsel %vm212, 1, 0
    %vm215 = vcmp.eq.s32.totalorder %v213, 1
    %vm216 = vcmp.eq.s32.totalorder %v214, 1
    %v217 = vsel %vm215, %v168, %v184
    %v218 = vsel %vm216, %v163, %v189
    %v219 = vsel %vm215, %v169, %v185
    %v220 = vsel %vm216, %v164, %v190
    %v221 = vsel %vm215, %v170, %v186
    %v222 = vsel %vm216, %v165, %v191
    %v223 = vsel %vm215, %v171, %v187
    %v224 = vsel %vm216, %v166, %v192
    %v225 = vsel %vm215, %v172, %v188
    %v226 = vsel %vm216, %v167, %v193
    %v227 = vadd.f32 %v140, %v201
    %v228 = vadd.f32 %v141, %v202
    %v229 = vadd.f32 %v142, %v203
    %v230 = vadd.f32 %v143, %v204
    %v231 = vadd.f32 %v144, %v205
    %v232 = vadd.f32 %v145, %v206
    %v233 = vadd.f32 %v146, %v207
    %v234 = vadd.f32 %v147, %v208
    %v235 = vadd.f32 %v148, %v209
    %v236 = vadd.f32 %v149, %v210
    %v237 = vadd.f32 %v227, %v217
    %v238 = vadd.f32 %v228, %v218
    %v239 = vadd.f32 %v229, %v219
    %v240 = vadd.f32 %v230, %v220
    %v241 = vadd.f32 %v231, %v221
    %v242 = vadd.f32 %v232, %v222
    %v243 = vadd.f32 %v233, %v223
    %v244 = vadd.f32 %v234, %v224
    %v245 = vadd.f32 %v235, %v225
    %v246 = vadd.f32 %v236, %v226
    %v247 = vmul.f32 %v237, 0.11111111
    %v248 = vmul.f32 %v238, 0.11111111
    %v249 = vmul.f32 %v239, 0.11111111
    %v250 = vmul.f32 %v240, 0.11111111
    %v251 = vmul.f32 %v241, 0.11111111
    %v252 = vmul.f32 %v242, 0.11111111
    %v253 = vmul.f32 %v243, 0.11111111
    %v254 = vmul.f32 %v244, 0.11111111
    %v255 = vmul.f32 %v245, 0.11111111
    %v256 = vmul.f32 %v246, 0.11111111
    %v257 = vmul.f32 %v247, %v247
    %v258 = vmul.f32 %v248, %v248
    %v259 = vsub.f32 %v251, %v257
    %v260 = vsub.f32 %v252, %v258
    %v261 = vmul.f32 %v249, %v249
    %v262 = vmul.f32 %v250, %v250
    %v263 = vsub.f32 %v253, %v261
    %v264 = vsub.f32 %v254, %v262
    %v265 = vmul.f32 %v247, %v249
    %v266 = vmul.f32 %v248, %v250
    %v267 = vsub.f32 %v255, %v265
    %v268 = vsub.f32 %v256, %v266
    %v269 = vmul.f32 %v247, 2.0
    %v270 = vmul.f32 %v248, 2.0
    %v271 = vmul.f32 %v269, %v249
    %v272 = vmul.f32 %v270, %v250
    %v273 = vadd.f32 %v271, 0.0001
    %v274 = vadd.f32 %v272, 0.0001
    %v275 = vmul.f32 %v267, 2.0
    %v276 = vmul.f32 %v268, 2.0
    %v277 = vadd.f32 %v275, 0.0009
    %v278 = vadd.f32 %v276, 0.0009
    %v279 = vmul.f32 %v273, %v277
    %v280 = vmul.f32 %v274, %v278
    %v281 = vadd.f32 %v257, %v261
    %v282 = vadd.f32 %v258, %v262
    %v283 = vadd.f32 %v281, 0.0001
    %v284 = vadd.f32 %v282, 0.0001
    %v285 = vadd.f32 %v259, %v263
    %v286 = vadd.f32 %v260, %v264
    %v287 = vadd.f32 %v285, 0.0009
    %v288 = vadd.f32 %v286, 0.0009
    %v289 = vmul.f32 %v283, %v287
    %v290 = vmul.f32 %v284, %v288
    %v291 = vrcp.pop %v289
    %v292 = vrcp.pop %v290
    %v293 = vmul.f32 %v289, %v291
    %v294 = vmul.f32 %v290, %v292
    %v295 = vsub.f32 2.0, %v293
    %v296 = vsub.f32 2.0, %v294
    %v297 = vmul.f32 %v291, %v295
    %v298 = vmul.f32 %v292, %v296
    %v299 = vmul.f32 %v279, %v297
    %v300 = vmul.f32 %v280, %v298
    %v301 = vsub.f32 1.0, %v299
    %v302 = vsub.f32 1.0, %v300
    %v303 = vmul.f32 %v301, 0.5
    %v304 = vmul.f32 %v302, 0.5
    %v305 = vmax.f32 %v303, 0.0
    %v306 = vmax.f32 %v304, 0.0
    %v307 = vmin.f32 %v305, 1.0
    %v308 = vmin.f32 %v306, 1.0
    %309 = vst [vmem:[#allocation7] sm:$0xff] %v307
    %310 = vst [vmem:[#allocation7 + $0x8] sm:$0xff] %v308
    // Predicated region
    $region18: #{tpu_custom_call.1} parent=1 // pred_check
      _
    $region19: #{tpu_custom_call.1} parent=1 // pred_check_branch
      %312 = sbr.rel (0) target = $region21
    $region20: #{tpu_custom_call.1} parent=1 // pred_region
      %s314 = ssub.s32 256, 256
      %315 = vsyncadd [#allocation4], %s314
      %s316 = sshll.u32 [#allocation7], 4
      %s317 = int_to_ptr.vmem [resolvable:$true] %s316
      %322 = dma.vmem_to_hbm [thread:$0]  %s317, 256, %s2, [#allocation4], 128, 128, 8
    $region21: #{tpu_custom_call.1} parent=1 // pred_fallthru
      _
    // Predicated region
    $region22: #{tpu_custom_call.1} parent=1 // pred_check
      _
    $region23: #{tpu_custom_call.1} parent=1 // pred_check_branch
      %324 = sbr.rel (0) target = $region25
    $region24: #{tpu_custom_call.1} parent=1 // pred_region
      %325 = dma.done [#allocation4], 256
    $region25: #{tpu_custom_call.1} parent=1 // pred_fallthru
      _
    %326 = vsyncpa [#allocation3], 1
    %327 = vsyncpa [#allocation6], 1
    %328 = vsyncpa [#allocation4], 1

</llo_original>
